<compile_context>
chip_gen: v7x
topology: tpu7x:2x2x1
jax: 0.10.0
libtpu: 0.0.40
codegen_flags: <defaults>
</compile_context>

<pallas_src>
import functools

import jax
import jax.numpy as jnp
import numpy as np
from jax import lax
from jax.experimental import pallas as pl
from jax.experimental.pallas import tpu as pltpu

_LANE = 128


def _round_up(x, m):
    return (x + m - 1) // m * m


def _nw_wavefront_kernel(th_ref, a0_ref, a1_ref, vt_ref, vp_ref, vpp_ref,
                         *, N, M, S):
    # th_ref/a0_ref/a1_ref : (1, S, L)  skewed diagonal slabs, row r = i-1
    # vt_ref               : (1, L)     output V[N, M] per batch lane
    # vp_ref               : (S, L)     diagonal d-1 : vp[r]  = V[r+1, d-1-(r+1)]
    # vpp_ref              : (S, L)     diagonal d-2 : vpp[r] = V[r+1, d-2-(r+1)]
    g = pl.program_id(1)          # diagonal step: d = g + 2
    D = N + M - 1
    L = vp_ref.shape[-1]

    @pl.when(g == 0)
    def _():
        vp_ref[...] = jnp.zeros_like(vp_ref)
        vpp_ref[...] = jnp.zeros_like(vpp_ref)

    vp = vp_ref[...]
    vpp = vpp_ref[...]

    ri = lax.broadcasted_iota(jnp.int32, (S, L), 0)
    row0 = ri == 0

    # Shift down one row (cell r reads position r-1) with zero fill at row 0,
    # which implements the V[0, *] = 0 boundary.  XLU roll, free next to EUP.
    vp_sh = jnp.where(row0, 0.0, pltpu.roll(vp, shift=1, axis=0))
    vpp_sh = jnp.where(row0, 0.0, pltpu.roll(vpp, shift=1, axis=0))

    a0 = a0_ref[0]
    a1 = a1_ref[0]
    th = th_ref[0]

    m0 = a0 + vp_sh               # A[b, 0, last, j-1] + V[i-1, j]
    m1 = vpp_sh                   # V[i-1, j-1]
    m2 = a1 + vp                  # A[b, 1, last, j-1] + V[i, j-1]

    mx = jnp.maximum(jnp.maximum(m0, m1), m2)
    s = jnp.exp(m0 - mx) + jnp.exp(m1 - mx) + jnp.exp(m2 - mx)
    v = th + mx + jnp.log(s)      # theta[i-1, j-1] + log-sum-exp

    # Cells valid on this diagonal: 1 <= i <= N, 1 <= j = d - i <= M.
    valid = (ri >= g - (M - 1)) & (ri <= jnp.minimum(g, N - 1))
    vnew = jnp.where(valid, v, 0.0)   # invalid rows stay 0 -> boundary reads ok

    vpp_ref[...] = vp             # diag d-1 becomes next step's d-2
    vp_ref[...] = vnew            # diag d   becomes next step's d-1

    @pl.when(g == D - 1)
    def _():
        # final diagonal contains V[N, M] at row r = N-1
        vt_ref[...] = vnew[N - 1:N, :]


def _skew(x_bnm, N, M, S, D, Bp):
    """(B, N, M) -> (D, S, Bp) with out[g, r, b] = x[b, r, g - r] (else 0)."""
    B = x_bnm.shape[0]
    x_t = jnp.transpose(x_bnm, (1, 2, 0))                    # (N, M, B)
    x_t = jnp.pad(x_t, ((0, S - N), (0, 0), (0, Bp - B)))    # (S, M, Bp)
    r = jnp.arange(S)
    g = jnp.arange(D)
    cols = g[:, None] - r[None, :]                           # (D, S): j-1 = g - r
    ok = (cols >= 0) & (cols < M) & (r[None, :] < N)
    cols_c = jnp.clip(cols, 0, M - 1)
    sk = x_t[r[None, :], cols_c, :]                          # (D, S, Bp)
    return jnp.where(ok[..., None], sk, 0.0).astype(jnp.float32)


@jax.jit
def nw_forward(theta, A):
    """Pallas wavefront implementation of NeedlemanWunschFunction.forward (Vt)."""
    if theta.dtype != jnp.float32:
        raise TypeError("only float32 supported (matches CUDA variant)")
    B, N, M = theta.shape
    D = N + M - 1
    S = _round_up(N, 8)

    # Lane tiling for the batch axis.
    if B % _LANE == 0:
        Bp, lane = B, _LANE
    elif B < _LANE:
        Bp, lane = B, B          # full-dim lane block, no HBM padding
    else:
        Bp, lane = _round_up(B, _LANE), _LANE
    nbt = Bp // lane

    # Broadcast the parity-indexed transition rows over i:  a*_full[b, i-1, j-1]
    row_par = jnp.arange(N) % 2                     # last = (i-1) % 2
    a0_full = jnp.take(A[:, 0], row_par, axis=1)    # (B, N, M)
    a1_full = jnp.take(A[:, 1], row_par, axis=1)    # (B, N, M)

    th_sk = _skew(theta, N, M, S, D, Bp)
    a0_sk = _skew(a0_full, N, M, S, D, Bp)
    a1_sk = _skew(a1_full, N, M, S, D, Bp)

    kernel = functools.partial(_nw_wavefront_kernel, N=N, M=M, S=S)
    vt = pl.pallas_call(
        kernel,
        out_shape=jax.ShapeDtypeStruct((1, Bp), jnp.float32),
        grid=(nbt, D),
        in_specs=[
            pl.BlockSpec((1, S, lane), lambda bt, g: (g, 0, bt)),
            pl.BlockSpec((1, S, lane), lambda bt, g: (g, 0, bt)),
            pl.BlockSpec((1, S, lane), lambda bt, g: (g, 0, bt)),
        ],
        out_specs=pl.BlockSpec((1, lane), lambda bt, g: (0, bt)),
        scratch_shapes=[
            pltpu.VMEM((S, lane), jnp.float32),   # diag d-1
            pltpu.VMEM((S, lane), jnp.float32),   # diag d-2
        ],
        compiler_params=pltpu.CompilerParams(
            dimension_semantics=("parallel", "arbitrary"),
        ),
    )(th_sk, a0_sk, a1_sk)
    return vt[0, :B]


class NeedlemanWunschDecoder:
    """JAX/Pallas mirror of the PyTorch module (forward pass only)."""

    def __init__(self, operator):
        if operator != "softmax":
            raise NotImplementedError("only 'softmax' operator supported")
        self.operator = operator

    def __call__(self, theta, A):
        return nw_forward(theta, A)
    # TODO(synk): traceback()/decode() rely on autograd-through-Q (backward /
    # adjoint kernels); only the forward DP (Vt) is implemented here.


def _nw_forward_ref(theta, A):
    """Pure-numpy reference mirroring _forward_pass_device exactly."""
    theta = np.asarray(theta, dtype=np.float32)
    A = np.asarray(A, dtype=np.float32)
    B, N, M = theta.shape
    out = np.zeros(B, dtype=np.float32)
    for b in range(B):
        V = np.zeros((2, M + 1), dtype=np.float64)
        last, curr = 0, 1
        for i in range(1, N + 1):
            for j in range(1, M + 1):
                m0 = A[b, 0, last, j - 1] + V[last, j]
                m1 = V[last, j - 1]
                m2 = A[b, 1, last, j - 1] + V[curr, j - 1]
                mx = max(m0, m1, m2)
                s = np.exp(m0 - mx) + np.exp(m1 - mx) + np.exp(m2 - mx)
                V[curr, j] = theta[b, i - 1, j - 1] + mx + np.log(s)
            last, curr = curr, last
        out[b] = V[last, M]
    return out


if __name__ == "__main__":
    B, N, M = 2, 8, 8
    key = jax.random.PRNGKey(0)
    k1, k2 = jax.random.split(key)
    theta = jax.random.normal(k1, (B, N, M), dtype=jnp.float32)
    # transition scores, indexed as A[b, {0,1}, last, j-1]
    A = -jnp.abs(jax.random.normal(k2, (B, 2, 2, M), dtype=jnp.float32))

    decoder = NeedlemanWunschDecoder("softmax")
    vt = jax.block_until_ready(decoder(theta, A))

    vt_ref = _nw_forward_ref(theta, A)
    np.testing.assert_allclose(np.asarray(vt), vt_ref, rtol=1e-4, atol=1e-4)

    print("KERNEL_OK")
</pallas_src>

<mosaic_0001>
module attributes {stable_mosaic.version = 11 : i64} {
  func.func @_nw_wavefront_kernel(%arg0: i32, %arg1: i32, %arg2: memref<1x8x2xf32, #tpu.memory_space<vmem>>, %arg3: memref<1x8x2xf32, #tpu.memory_space<vmem>>, %arg4: memref<1x8x2xf32, #tpu.memory_space<vmem>>, %arg5: memref<1x2xf32, #tpu.memory_space<vmem>>, %arg6: memref<8x2xf32, #tpu.memory_space<vmem>>, %arg7: memref<8x2xf32, #tpu.memory_space<vmem>>) attributes {dimension_semantics = [#tpu.dimension_semantics<parallel>, #tpu.dimension_semantics<arbitrary>], iteration_bounds = array<i64: 1, 15>, scalar_prefetch = 0 : i64, scratch_operands = 2 : i64, tpu.core_type = #tpu.core_type<tc>, window_params = [{transform_indices = @transform_0, window_bounds = array<i64: 1, 8, 2>}, {transform_indices = @transform_1, window_bounds = array<i64: 1, 8, 2>}, {transform_indices = @transform_2, window_bounds = array<i64: 1, 8, 2>}, {transform_indices = @transform_3, window_bounds = array<i64: 1, 2>}]} {
    %c0_i32 = arith.constant 0 : i32
    %0 = arith.cmpi eq, %arg1, %c0_i32 : i32
    %1 = arith.extui %0 : i1 to i32
    %c0_i32_0 = arith.constant 0 : i32
    %2 = arith.cmpi ne, %1, %c0_i32_0 : i32
    scf.if %2 {
      %cst_23 = arith.constant 0.000000e+00 : f32
      %49 = vector.broadcast %cst_23 : f32 to vector<8x2xf32>
      %c0_24 = arith.constant 0 : index
      %c0_25 = arith.constant 0 : index
      %50 = vector.load %arg6[%c0_24, %c0_25] : memref<8x2xf32, #tpu.memory_space<vmem>>, vector<8x2xf32>
      tpu.vector_store %arg6[%c0_24, %c0_25], %49 {strides = array<i32>} : memref<8x2xf32, #tpu.memory_space<vmem>>, vector<8x2xf32>,
      %cst_26 = arith.constant 0.000000e+00 : f32
      %51 = vector.broadcast %cst_26 : f32 to vector<8x2xf32>
      %c0_27 = arith.constant 0 : index
      %c0_28 = arith.constant 0 : index
      %52 = vector.load %arg7[%c0_27, %c0_28] : memref<8x2xf32, #tpu.memory_space<vmem>>, vector<8x2xf32>
      tpu.vector_store %arg7[%c0_27, %c0_28], %51 {strides = array<i32>} : memref<8x2xf32, #tpu.memory_space<vmem>>, vector<8x2xf32>,
    } else {
    }
    %c0 = arith.constant 0 : index
    %c0_1 = arith.constant 0 : index
    %3 = vector.load %arg6[%c0, %c0_1] : memref<8x2xf32, #tpu.memory_space<vmem>>, vector<8x2xf32>
    %c0_2 = arith.constant 0 : index
    %c0_3 = arith.constant 0 : index
    %4 = vector.load %arg7[%c0_2, %c0_3] : memref<8x2xf32, #tpu.memory_space<vmem>>, vector<8x2xf32>
    %5 = tpu.iota {dimensions = array<i32: 0>} : vector<8x2xi32>
    %c0_i32_4 = arith.constant 0 : i32
    %6 = vector.broadcast %c0_i32_4 : i32 to vector<8x2xi32>
    %7 = arith.cmpi eq, %5, %6 : vector<8x2xi32>
    %c1_i32 = arith.constant 1 : i32
    %8 = tpu.dynamic_rotate %3 by %c1_i32 dim 0 : vector<8x2xf32>, i32 -> vector<8x2xf32>
    %cst = arith.constant 0.000000e+00 : f32
    %9 = vector.broadcast %cst : f32 to vector<8x2xf32>
    %10 = arith.select %7, %9, %8 : vector<8x2xi1>, vector<8x2xf32>
    %c1_i32_5 = arith.constant 1 : i32
    %11 = tpu.dynamic_rotate %4 by %c1_i32_5 dim 0 : vector<8x2xf32>, i32 -> vector<8x2xf32>
    %cst_6 = arith.constant 0.000000e+00 : f32
    %12 = vector.broadcast %cst_6 : f32 to vector<8x2xf32>
    %13 = arith.select %7, %12, %11 : vector<8x2xi1>, vector<8x2xf32>
    %c0_7 = arith.constant 0 : index
    %c0_8 = arith.constant 0 : index
    %c0_9 = arith.constant 0 : index
    %14 = vector.load %arg3[%c0_7, %c0_8, %c0_9] : memref<1x8x2xf32, #tpu.memory_space<vmem>>, vector<1x8x2xf32>
    %15 = vector.shape_cast %14 : vector<1x8x2xf32> to vector<8x2xf32>
    %c0_10 = arith.constant 0 : index
    %c0_11 = arith.constant 0 : index
    %c0_12 = arith.constant 0 : index
    %16 = vector.load %arg4[%c0_10, %c0_11, %c0_12] : memref<1x8x2xf32, #tpu.memory_space<vmem>>, vector<1x8x2xf32>
    %17 = vector.shape_cast %16 : vector<1x8x2xf32> to vector<8x2xf32>
    %c0_13 = arith.constant 0 : index
    %c0_14 = arith.constant 0 : index
    %c0_15 = arith.constant 0 : index
    %18 = vector.load %arg2[%c0_13, %c0_14, %c0_15] : memref<1x8x2xf32, #tpu.memory_space<vmem>>, vector<1x8x2xf32>
    %19 = vector.shape_cast %18 : vector<1x8x2xf32> to vector<8x2xf32>
    %20 = arith.addf %15, %10 : vector<8x2xf32>
    %21 = arith.addf %17, %3 : vector<8x2xf32>
    %22 = arith.maximumf %20, %13 : vector<8x2xf32>
    %23 = arith.maximumf %22, %21 : vector<8x2xf32>
    %24 = arith.subf %20, %23 : vector<8x2xf32>
    %25 = math.exp %24 : vector<8x2xf32>
    %26 = arith.subf %13, %23 : vector<8x2xf32>
    %27 = math.exp %26 : vector<8x2xf32>
    %28 = arith.addf %25, %27 : vector<8x2xf32>
    %29 = arith.subf %21, %23 : vector<8x2xf32>
    %30 = math.exp %29 : vector<8x2xf32>
    %31 = arith.addf %28, %30 : vector<8x2xf32>
    %32 = arith.addf %19, %23 : vector<8x2xf32>
    %33 = math.log %31 : vector<8x2xf32>
    %34 = arith.addf %32, %33 : vector<8x2xf32>
    %c7_i32 = arith.constant 7 : i32
    %35 = arith.subi %arg1, %c7_i32 : i32
    %36 = vector.broadcast %35 : i32 to vector<8x2xi32>
    %37 = arith.cmpi sge, %5, %36 : vector<8x2xi32>
    %c7_i32_16 = arith.constant 7 : i32
    %38 = arith.minsi %arg1, %c7_i32_16 : i32
    %39 = vector.broadcast %38 : i32 to vector<8x2xi32>
    %40 = arith.cmpi sle, %5, %39 : vector<8x2xi32>
    %41 = arith.andi %37, %40 : vector<8x2xi1>
    %cst_17 = arith.constant 0.000000e+00 : f32
    %42 = vector.broadcast %cst_17 : f32 to vector<8x2xf32>
    %43 = arith.select %41, %34, %42 : vector<8x2xi1>, vector<8x2xf32>
    %c0_18 = arith.constant 0 : index
    %c0_19 = arith.constant 0 : index
    %44 = vector.load %arg7[%c0_18, %c0_19] : memref<8x2xf32, #tpu.memory_space<vmem>>, vector<8x2xf32>
    tpu.vector_store %arg7[%c0_18, %c0_19], %3 {strides = array<i32>} : memref<8x2xf32, #tpu.memory_space<vmem>>, vector<8x2xf32>,
    %c0_20 = arith.constant 0 : index
    %c0_21 = arith.constant 0 : index
    %45 = vector.load %arg6[%c0_20, %c0_21] : memref<8x2xf32, #tpu.memory_space<vmem>>, vector<8x2xf32>
    tpu.vector_store %arg6[%c0_20, %c0_21], %43 {strides = array<i32>} : memref<8x2xf32, #tpu.memory_space<vmem>>, vector<8x2xf32>,
    %c14_i32 = arith.constant 14 : i32
    %46 = arith.cmpi eq, %arg1, %c14_i32 : i32
    %47 = arith.extui %46 : i1 to i32
    %c0_i32_22 = arith.constant 0 : i32
    %48 = arith.cmpi ne, %47, %c0_i32_22 : i32
    scf.if %48 {
      %49 = vector.extract_strided_slice %43 {offsets = [7, 0], sizes = [1, 2], strides = [1, 1]} : vector<8x2xf32> to vector<1x2xf32>
      %c0_23 = arith.constant 0 : index
      %c0_24 = arith.constant 0 : index
      %50 = vector.load %arg5[%c0_23, %c0_24] : memref<1x2xf32, #tpu.memory_space<vmem>>, vector<1x2xf32>
      tpu.vector_store %arg5[%c0_23, %c0_24], %49 {strides = array<i32>} : memref<1x2xf32, #tpu.memory_space<vmem>>, vector<1x2xf32>,
    } else {
    }
    return
  }
  func.func @transform_0(%arg0: i32, %arg1: i32) -> (i32, i32, i32) {
    %c0_i32 = arith.constant 0 : i32
    %c0_i32_0 = arith.constant 0 : i32
    return %arg1, %c0_i32, %arg0 : i32, i32, i32
  }
  func.func @transform_1(%arg0: i32, %arg1: i32) -> (i32, i32, i32) {
    %c0_i32 = arith.constant 0 : i32
    %c0_i32_0 = arith.constant 0 : i32
    return %arg1, %c0_i32, %arg0 : i32, i32, i32
  }
  func.func @transform_2(%arg0: i32, %arg1: i32) -> (i32, i32, i32) {
    %c0_i32 = arith.constant 0 : i32
    %c0_i32_0 = arith.constant 0 : i32
    return %arg1, %c0_i32, %arg0 : i32, i32, i32
  }
  func.func @transform_3(%arg0: i32, %arg1: i32) -> (i32, i32) {
    %c0_i32 = arith.constant 0 : i32
    %c0_i32_0 = arith.constant 0 : i32
    return %c0_i32, %arg0 : i32, i32
  }
}

</mosaic_0001>

<llo_original>
// kernel: nw_forward.1
$region0: #{nw_forward.1}
  #allocation0 [shape = 'u32[]', space=smem, size = 0x4, offset = 0x4, fixed_abs, tag = 'smem constant byte address 0x4 - core index']
  #allocation1 [shape = 'u32[144,128]{1,0:T(1,128)}', space=vmem, size = 0x12000, scoped, tag = 'internal scratch']
  #allocation2 [shape = 'f32[8,2]{1,0:T(8,128)}', space=vmem, size = 0x1000, scoped, tag = 'scratch operand']
  #allocation3 [shape = 'f32[8,2]{1,0:T(8,128)}', space=vmem, size = 0x1000, scoped, tag = 'scratch operand']
  %s0 = inlined_call_operand.vmem [shape: f32[15,8,2], index: 0, kind: input, shape index: {}]
  %s1 = inlined_call_operand.vmem [shape: f32[15,8,2], index: 1, kind: input, shape index: {}]
  %s2 = inlined_call_operand.vmem [shape: f32[15,8,2], index: 2, kind: input, shape index: {}]
  %s3 = inlined_call_operand.hbm [shape: f32[1,2], index: 3, kind: output, shape index: {}]
  %s4 = sld [smem:[#allocation0]]
  $region53: #{nw_forward.1} parent=0
    _
  %s6 = ssub.s32 1, %s4
  %s7 = scalar_select 0, %s6, %s4
  $region1: #{nw_forward.1} parent=0
    #allocation4 [shape = 'u8[512]{0}', space=vmem, size = 0x400, scoped, tag = 'output window, operand 0, single buffered']
    #allocation5 [shape = 's32[2]{0}', space=sflag, size = 0x8, scoped, tag = 'scoped memory for nw_forward.1']
    %8 = vsyncpa [#allocation5], 0
    loop: start=0, step=1, limit=17
    $region2: #{nw_forward.1} parent=1 // loop_pre_header
      _
    $region3: #{nw_forward.1} parent=1 // loop_header
      %s10 = sphi 0, %s14
      %p11 = scmp.ge.s32.totalorder %s10, 17
      %s17 = sphi 0, %s29
      %s18 = sphi 0, %s25
      %s19 = sphi 0, %s17
      %s20 = sphi 0, %s18
      %s21 = sphi 0, %s19
      %s22 = sphi 0, %s20
      %s34 = sphi 0, %s36
      %s37 = sphi 0, %s34
      %s38 = sphi 0, %s37
      %s54 = sphi 0, %s38
      %s62 = sphi 0, %s64
      %s65 = sphi 0, %s62
      %s66 = sphi 0, %s65
      %s82 = sphi 0, %s66
      %s90 = sphi 0, %s92
      %s93 = sphi 0, %s90
      %s94 = sphi 0, %s93
      %s110 = sphi 0, %s94
      %s116 = sphi 0, %s118
      %s119 = sphi 0, %s116
      %s120 = sphi 0, %s119
      %s136 = sphi 0, %s120
    $region4: #{nw_forward.1} parent=1 // loop_header_branch
      %13 = sbr.rel (%p11) target = $region8
    $region5: #{nw_forward.1} parent=1 // loop_body
      %s15 = ssub.s32 %s10, 1
      %s16 = ssub.s32 %s10, 2
      %s23 = sadd.s32 1, %s18
      %p24 = scmp.ge.s32.totalorder %s23, 15
      %s25 = scalar_select %p24, 0, %s23
      %s26 = sadd.s32 1, %s17
      %s27 = scalar_select %p24, %s26, %s17
      %p28 = scmp.ge.s32.totalorder %s27, 1
      %s29 = scalar_select %p28, 0, %s27
      %s30 = ssub.s32 %s18, %s25
      %s31 = ssub.s32 %s17, %s29
      %s32 = sor.u32 %s30, %s31
      %p33 = scmp.eq.s32.totalorder %s32, 0
      %s35 = sadd.s32 %s34, 1
      %s36 = scalar_select %p33, %s34, %s35
      %p39 = pneg %p33
      %p40 = scmp.eq.s32.totalorder %s10, 14
      %p41 = por %p39, %p40
      %p42 = scmp.ne.s32.totalorder %s34, %s37
      %p43 = scmp.eq.s32.totalorder %s10, 0
      %p44 = por %p42, %p43
      %p45 = scmp.ne.s32.totalorder %s34, %s37
      %p46 = scmp.eq.s32.totalorder %s15, 14
      %p47 = por %p45, %p46
      %p48 = scmp.ne.s32.totalorder %s37, %s38
      %p49 = scmp.eq.s32.totalorder %s15, 0
      %p50 = por %p48, %p49
      %p51 = scmp.ne.s32.totalorder %s37, %s38
      %p52 = scmp.eq.s32.totalorder %s16, 14
      %p53 = por %p51, %p52
      %p55 = scmp.ne.s32.totalorder %s38, %s54
      %p56 = scmp.eq.s32.totalorder %s16, 0
      %p57 = por %p55, %p56
      %s58 = ssub.s32 %s18, %s25
      %s59 = ssub.s32 %s17, %s29
      %s60 = sor.u32 %s58, %s59
      %p61 = scmp.eq.s32.totalorder %s60, 0
      %s63 = sadd.s32 %s62, 1
      %s64 = scalar_select %p61, %s62, %s63
      %p67 = pneg %p61
      %p68 = scmp.eq.s32.totalorder %s10, 14
      %p69 = por %p67, %p68
      %p70 = scmp.ne.s32.totalorder %s62, %s65
      %p71 = scmp.eq.s32.totalorder %s10, 0
      %p72 = por %p70, %p71
      %p73 = scmp.ne.s32.totalorder %s62, %s65
      %p74 = scmp.eq.s32.totalorder %s15, 14
      %p75 = por %p73, %p74
      %p76 = scmp.ne.s32.totalorder %s65, %s66
      %p77 = scmp.eq.s32.totalorder %s15, 0
      %p78 = por %p76, %p77
      %p79 = scmp.ne.s32.totalorder %s65, %s66
      %p80 = scmp.eq.s32.totalorder %s16, 14
      %p81 = por %p79, %p80
      %p83 = scmp.ne.s32.totalorder %s66, %s82
      %p84 = scmp.eq.s32.totalorder %s16, 0
      %p85 = por %p83, %p84
      %s86 = ssub.s32 %s18, %s25
      %s87 = ssub.s32 %s17, %s29
      %s88 = sor.u32 %s86, %s87
      %p89 = scmp.eq.s32.totalorder %s88, 0
      %s91 = sadd.s32 %s90, 1
      %s92 = scalar_select %p89, %s90, %s91
      %p95 = pneg %p89
      %p96 = scmp.eq.s32.totalorder %s10, 14
      %p97 = por %p95, %p96
      %p98 = scmp.ne.s32.totalorder %s90, %s93
      %p99 = scmp.eq.s32.totalorder %s10, 0
      %p100 = por %p98, %p99
      %p101 = scmp.ne.s32.totalorder %s90, %s93
      %p102 = scmp.eq.s32.totalorder %s15, 14
      %p103 = por %p101, %p102
      %p104 = scmp.ne.s32.totalorder %s93, %s94
      %p105 = scmp.eq.s32.totalorder %s15, 0
      %p106 = por %p104, %p105
      %p107 = scmp.ne.s32.totalorder %s93, %s94
      %p108 = scmp.eq.s32.totalorder %s16, 14
      %p109 = por %p107, %p108
      %p111 = scmp.ne.s32.totalorder %s94, %s110
      %p112 = scmp.eq.s32.totalorder %s16, 0
      %p113 = por %p111, %p112
      %s114 = ssub.s32 %s17, %s29
      %p115 = scmp.eq.s32.totalorder %s114, 0
      %s117 = sadd.s32 %s116, 1
      %s118 = scalar_select %p115, %s116, %s117
      %p121 = pneg %p115
      %p122 = scmp.eq.s32.totalorder %s10, 14
      %p123 = por %p121, %p122
      %p124 = scmp.ne.s32.totalorder %s116, %s119
      %p125 = scmp.eq.s32.totalorder %s10, 0
      %p126 = por %p124, %p125
      %p127 = scmp.ne.s32.totalorder %s116, %s119
      %p128 = scmp.eq.s32.totalorder %s15, 14
      %p129 = por %p127, %p128
      %p130 = scmp.ne.s32.totalorder %s119, %s120
      %p131 = scmp.eq.s32.totalorder %s15, 0
      %p132 = por %p130, %p131
      %p133 = scmp.ne.s32.totalorder %s119, %s120
      %p134 = scmp.eq.s32.totalorder %s16, 14
      %p135 = por %p133, %p134
      %p137 = scmp.ne.s32.totalorder %s120, %s136
      %p138 = scmp.eq.s32.totalorder %s16, 0
      %p139 = por %p137, %p138
      %p140 = scmp.le.s32.totalorder 1, %s10
      %p141 = scmp.lt.s32.totalorder %s10, 16
      %p142 = pnand %p140, %p141
      %p143 = pneg %p142
      // Predicated region
      $region9: #{nw_forward.1} parent=5 // pred_check
        _
      $region10: #{nw_forward.1} parent=5 // pred_check_branch
        %145 = sbr.rel (%p142) target = $region12
      $region11: #{nw_forward.1} parent=5 // pred_region
        %s146 = ssub.s32 %s10, 1
      $region12: #{nw_forward.1} parent=5 // pred_fallthru
        _
      %p147 = scmp.lt.s32.totalorder %s10, 15
      // Predicated region
      $region13: #{nw_forward.1} parent=5 // pred_check
        %p148 = pneg %p147
      $region14: #{nw_forward.1} parent=5 // pred_check_branch
        %150 = sbr.rel (%p148) target = $region16
      $region15: #{nw_forward.1} parent=5 // pred_region
        // Predicated region
        $region17: #{nw_forward.1} parent=15 // pred_check
          %p151 = pneg %p44
        $region18: #{nw_forward.1} parent=15 // pred_check_branch
          %153 = sbr.rel (%p151) target = $region20
        $region19: #{nw_forward.1} parent=15 // pred_region
          %p154 = scmp.lt.s32.totalorder %s18, 14
          %s155 = scalar_select %p154, %s18, 14
          %p156 = scmp.lt.s32.totalorder %s17, 0
          %s157 = scalar_select %p156, %s17, 0
          %s158 = sadd.s32 %s157, %s155
          %s159 = smul.addr %s158, 8
          %s160 = scalar_lea.vmem %s0, %s159
        $region20: #{nw_forward.1} parent=15 // pred_fallthru
          _
        // Predicated region
        $region21: #{nw_forward.1} parent=15 // pred_check
          %p161 = pneg %p72
        $region22: #{nw_forward.1} parent=15 // pred_check_branch
          %163 = sbr.rel (%p161) target = $region24
        $region23: #{nw_forward.1} parent=15 // pred_region
          %p164 = scmp.lt.s32.totalorder %s18, 14
          %s165 = scalar_select %p164, %s18, 14
          %p166 = scmp.lt.s32.totalorder %s17, 0
          %s167 = scalar_select %p166, %s17, 0
          %s168 = sadd.s32 %s167, %s165
          %s169 = smul.addr %s168, 8
          %s170 = scalar_lea.vmem %s1, %s169
        $region24: #{nw_forward.1} parent=15 // pred_fallthru
          _
        // Predicated region
        $region25: #{nw_forward.1} parent=15 // pred_check
          %p171 = pneg %p100
        $region26: #{nw_forward.1} parent=15 // pred_check_branch
          %173 = sbr.rel (%p171) target = $region28
        $region27: #{nw_forward.1} parent=15 // pred_region
          %p174 = scmp.lt.s32.totalorder %s18, 14
          %s175 = scalar_select %p174, %s18, 14
          %p176 = scmp.lt.s32.totalorder %s17, 0
          %s177 = scalar_select %p176, %s17, 0
          %s178 = sadd.s32 %s177, %s175
          %s179 = smul.addr %s178, 8
          %s180 = scalar_lea.vmem %s2, %s179
        $region28: #{nw_forward.1} parent=15 // pred_fallthru
          _
      $region16: #{nw_forward.1} parent=5 // pred_fallthru
        _
      %p181 = scmp.le.s32.totalorder 1, %s10
      %p182 = scmp.lt.s32.totalorder %s10, 16
      %p183 = pnand %p181, %p182
      %p184 = pneg %p183
      // Predicated region
      $region29: #{nw_forward.1} parent=5 // pred_check
        _
      $region30: #{nw_forward.1} parent=5 // pred_check_branch
        %186 = sbr.rel (%p183) target = $region32
      $region31: #{nw_forward.1} parent=5 // pred_region
        %s187 = ssub.s32 %s10, 1
        %p188 = scmp.lt.s32.totalorder %s20, 14
        %s189 = scalar_select %p188, %s20, 14
        %p190 = scmp.lt.s32.totalorder %s19, 0
        %s191 = scalar_select %p190, %s19, 0
        %s192 = sadd.s32 %s191, %s189
        %s193 = smul.addr %s192, 8
        %s194 = scalar_lea.vmem %s0, %s193
        %p195 = pneg %p50
        %p196 = pneg %p47
        %p197 = scmp.lt.s32.totalorder %s20, 14
        %s198 = scalar_select %p197, %s20, 14
        %p199 = scmp.lt.s32.totalorder %s19, 0
        %s200 = scalar_select %p199, %s19, 0
        %s201 = sadd.s32 %s200, %s198
        %s202 = smul.addr %s201, 8
        %s203 = scalar_lea.vmem %s1, %s202
        %p204 = pneg %p78
        %p205 = pneg %p75
        %p206 = scmp.lt.s32.totalorder %s20, 14
        %s207 = scalar_select %p206, %s20, 14
        %p208 = scmp.lt.s32.totalorder %s19, 0
        %s209 = scalar_select %p208, %s19, 0
        %s210 = sadd.s32 %s209, %s207
        %s211 = smul.addr %s210, 8
        %s212 = scalar_lea.vmem %s2, %s211
        %p213 = pneg %p106
        %p214 = pneg %p103
        %p215 = pneg %p132
        %p216 = pneg %p129
        %p217 = scmp.lt.s32.totalorder %s20, 14
        %s218 = scalar_select %p217, %s20, 14
        %p219 = scmp.lt.s32.totalorder %s19, 0
        %s220 = scalar_select %p219, %s19, 0
        %s221 = sadd.s32 %s220, %s218
        %s222 = smul.addr %s221, 8
        %s223 = scalar_lea.vmem %s0, %s222
        %p224 = scmp.lt.s32.totalorder %s20, 14
        %s225 = scalar_select %p224, %s20, 14
        %p226 = scmp.lt.s32.totalorder %s19, 0
        %s227 = scalar_select %p226, %s19, 0
        %s228 = sadd.s32 %s227, %s225
        %s229 = smul.addr %s228, 8
        %s230 = scalar_lea.vmem %s1, %s229
        %p231 = scmp.lt.s32.totalorder %s20, 14
        %s232 = scalar_select %p231, %s20, 14
        %p233 = scmp.lt.s32.totalorder %s19, 0
        %s234 = scalar_select %p233, %s19, 0
        %s235 = sadd.s32 %s234, %s232
        %s236 = smul.addr %s235, 8
        %s237 = scalar_lea.vmem %s2, %s236
        %p238 = scmp.eq.s32.totalorder %s20, 0
        // Predicated region
        $region33: #{nw_forward.1} parent=31 // pred_check
          %p239 = pneg %p238
        $region34: #{nw_forward.1} parent=31 // pred_check_branch
          %241 = sbr.rel (%p239) target = $region36
        $region35: #{nw_forward.1} parent=31 // pred_region
          %vm242 = vcmask 15360
          %243 = vst.msk [vmem:[#allocation2] sm:$0xff] %vm242, 0.0
          %244 = vst.msk [vmem:[#allocation3] sm:$0xff] %vm242, 0.0
        $region36: #{nw_forward.1} parent=31 // pred_fallthru
          _
        %v245 = vld [vmem:[#allocation2] sm:$0xff]
        %v246 = vld [vmem:[#allocation3] sm:$0xff]
        %v247 = vlaneseq
        %v248 = vshrl.u32 %v247, 7
        %vm249 = vcmp.eq.s32.totalorder %v248, 0
        %v250 = vrot.slane %v245, 7
        %v251 = vsel %vm249, 0.0, %v250
        %v252 = vrot.slane %v246, 7
        %v253 = vsel %vm249, 0.0, %v252
        %v254 = vld [vmem:[%s230] sm:$0xff]
        %v255 = vld [vmem:[%s237] sm:$0xff]
        %v256 = vld [vmem:[%s223] sm:$0xff]
        %v257 = vadd.f32 %v254, %v251
        %v258 = vadd.f32 %v255, %v245
        %v259 = vmax.f32 %v257, %v253
        %v260 = vmax.f32 %v259, %v258
        %v261 = vsub.f32 %v257, %v260
        %v262 = vmul.f32 %v261, 1.442695
        %v263 = vpow.pop %v262
        %v264 = vsub.f32 %v253, %v260
        %v265 = vmul.f32 %v264, 1.442695
        %v266 = vpow.pop %v265
        %v267 = vadd.f32 %v263, %v266
        %v268 = vsub.f32 %v258, %v260
        %v269 = vmul.f32 %v268, 1.442695
        %v270 = vpow.pop %v269
        %v271 = vadd.f32 %v267, %v270
        %v272 = vadd.f32 %v256, %v260
        %v273 = vlog2.pop %v271
        %v274 = vmul.f32 %v273, 0.6931472
        %v275 = vadd.f32 %v272, %v274
        %s276 = ssub.s32 %s20, 7
        %v277 = vstv %s276
        %vm278 = vcmp.ge.s32.totalorder %v248, %v277
        %p279 = scmp.lt.s32.totalorder %s20, 7
        %s280 = scalar_select %p279, %s20, 7
        %v281 = vstv %s280
        %vm282 = vcmp.le.s32.totalorder %v248, %v281
        %vm283 = vmand %vm278, %vm282
        %v284 = vsel %vm283, %v275, 0.0
        %vm285 = vcmask 15360
        %286 = vst.msk [vmem:[#allocation3] sm:$0xff] %vm285, %v245
        %287 = vst.msk [vmem:[#allocation2] sm:$0xff] %vm285, %v284
        %p288 = scmp.eq.s32.totalorder %s20, 14
        // Predicated region
        $region37: #{nw_forward.1} parent=31 // pred_check
          %p289 = pneg %p288
        $region38: #{nw_forward.1} parent=31 // pred_check_branch
          %291 = sbr.rel (%p289) target = $region40
        $region39: #{nw_forward.1} parent=31 // pred_region
          %vm292 = vcmask 15367
          %293 = vst.msk [vmem:[#allocation4 - $0x7] sm:$0x80] %vm292, %v284
        $region40: #{nw_forward.1} parent=31 // pred_fallthru
          _
        // Predicated region
        $region41: #{nw_forward.1} parent=31 // pred_check
          %p294 = pneg %p129
        $region42: #{nw_forward.1} parent=31 // pred_check_branch
          %296 = sbr.rel (%p294) target = $region44
        $region43: #{nw_forward.1} parent=31 // pred_region
          %s298 = ssub.s32 16, 16
          %299 = vsyncadd [#allocation5], %s298
          %s300 = smul.addr %s19, 16
          %s301 = scalar_lea.hbm %s3, %s300
          %s303 = sshll.u32 [#allocation4], 4
          %s304 = int_to_ptr.vmem [resolvable:$true] %s303
          %306 = dma.vmem_to_hbm [thread:$0]  %s304, 16, %s301, [#allocation5]
        $region44: #{nw_forward.1} parent=31 // pred_fallthru
          _
        // Predicated region
        $region45: #{nw_forward.1} parent=31 // pred_check
          %p307 = pneg %p129
        $region46: #{nw_forward.1} parent=31 // pred_check_branch
          %309 = sbr.rel (%p307) target = $region48
        $region47: #{nw_forward.1} parent=31 // pred_region
          %310 = dma.done [#allocation5], 16
        $region48: #{nw_forward.1} parent=31 // pred_fallthru
          _
      $region32: #{nw_forward.1} parent=5 // pred_fallthru
        _
      %p311 = scmp.le.s32.totalorder 2, %s10
      // Predicated region
      $region49: #{nw_forward.1} parent=5 // pred_check
        %p312 = pneg %p311
      $region50: #{nw_forward.1} parent=5 // pred_check_branch
        %314 = sbr.rel (%p312) target = $region52
      $region51: #{nw_forward.1} parent=5 // pred_region
        %s315 = ssub.s32 %s10, 2
      $region52: #{nw_forward.1} parent=5 // pred_fallthru
        _
    $region6: #{nw_forward.1} parent=1 // loop_footer
      %s14 = sadd.s32 1, %s10
    $region7: #{nw_forward.1} parent=1 // loop_footer_branch
      %9 = sbr.rel target = $region3
    $region8: #{nw_forward.1} parent=1 // loop_exit
      _
    %316 = vsyncpa [#allocation5], 1
    %s317 = scalar_lea.sflag [#allocation5], 1
    %318 = vsyncpa %s317, 1

</llo_original>
